<compile_context>
chip_gen: v6e
topology: v6e:2x2x1
jax: 0.10.0
libtpu: 0.0.40
codegen_flags: <defaults>
</compile_context>

<pallas_src>
import functools

import jax
import jax.numpy as jnp
from jax.experimental import pallas as pl
from jax.experimental.pallas import tpu as pltpu


# ----------------------------------------------------------------------------
# Kernel: lane-dense channel split.
#   x_ref : (block_b, 3*HW)  VMEM tile (lanes = flattened C*H*W)
#   sN_ref: (block_b, HW)    VMEM tiles -> unmasked, lane-dense stores
# The channel boundaries sit at 128-aligned lane offsets (HW % 128 == 0), so
# each slice is whole-vreg selection: no XLU shuffles, no masked stores.
# ----------------------------------------------------------------------------
def _split_kernel(x_ref, s0_ref, s1_ref, s2_ref):
    hw = s0_ref.shape[-1]
    x = x_ref[...]
    s0_ref[...] = x[:, 0 * hw:1 * hw]
    s1_ref[...] = x[:, 1 * hw:2 * hw]
    s2_ref[...] = x[:, 2 * hw:3 * hw]


def _target_input_block_bytes():
    """Per-step input-block budget, derived from the chip's VMEM capacity.

    Double-buffered footprint is ~4x the input block (input + equal-sized
    outputs, x2 buffers).  Keeping the input block at vmem/16 leaves plenty of
    headroom on every generation (v5e/v6e: 128 MiB -> 8 MiB blocks, v7x:
    64 MiB -> 4 MiB blocks).
    """
    try:
        vmem = int(pltpu.get_tpu_info().vmem_capacity_bytes)
    except Exception:  # pragma: no cover - conservative fallback
        vmem = 64 * 1024 * 1024
    return max(2 * 1024 * 1024, min(8 * 1024 * 1024, vmem // 16))


def _sublane_align(dtype):
    """Second-minor tile alignment required once the batch axis is tiled."""
    return {1: 32, 2: 16, 4: 8, 8: 8}.get(jnp.dtype(dtype).itemsize, 8)


def _pick_block_b(B, row_bytes, dtype):
    """Pick the batch-block size (second-minor dim of all blocks).

    row_bytes = C*H*W*itemsize (bytes per batch row of the input).
    Rules:
      * tiny tensors: one step over the whole batch (block == full dim is
        always a legal tile shape);
      * otherwise: biggest dtype-aligned block within the per-step budget,
        and at least 2 grid steps so both v7x TensorCores get work.
    """
    align = _sublane_align(dtype)
    total_bytes = B * row_bytes

    if total_bytes <= 2 * 1024 * 1024 or B < 2 * align:
        return B  # single step; block equals full batch dim (always legal)

    target = _target_input_block_bytes()
    rows = (target // row_bytes // align) * align
    rows = max(align, rows)

    # Guarantee >= 2 grid steps (v7x megacore sharding via "parallel").
    half = (((B + 1) // 2) // align) * align
    if half >= align:
        rows = min(rows, half)
    if rows >= B:
        return B
    return rows


def _splits_pallas_impl(x):
    """Produce the three (B,1,H,W) split pieces with one lane-dense kernel."""
    B, C, H, W = x.shape
    assert C == 3, "module splits dim=1 into [1, 1, 1]"
    HW = H * W
    assert HW % 128 == 0, "pallas path requires lane-aligned channel planes"
    itemsize = jnp.dtype(x.dtype).itemsize

    x2 = x.reshape(B, C * HW)  # contiguous reshape -> free

    row_bytes = C * HW * itemsize
    block_b = _pick_block_b(B, row_bytes, x.dtype)
    grid = (pl.cdiv(B, block_b),)

    # Explicit VMEM accounting: (input block + 3 output blocks) x 2 buffers,
    # plus headroom for compiler-internal scratch.
    per_step_bytes = 2 * block_b * row_bytes     # in + outs are equal-sized
    vmem_limit = 2 * per_step_bytes + (2 << 20)  # double buffer + 2 MiB slack

    s0, s1, s2 = pl.pallas_call(
        _split_kernel,
        out_shape=tuple(
            jax.ShapeDtypeStruct((B, HW), x.dtype) for _ in range(3)
        ),
        grid=grid,
        in_specs=[pl.BlockSpec((block_b, C * HW), lambda i: (i, 0))],
        out_specs=tuple(
            pl.BlockSpec((block_b, HW), lambda i: (i, 0)) for _ in range(3)
        ),
        compiler_params=pltpu.CompilerParams(
            dimension_semantics=("parallel",),
            vmem_limit_bytes=int(vmem_limit),
        ),
    )(x2)

    # (B, HW) -> (B, 1, H, W): contiguous reshape, free inside jit.
    return tuple(s.reshape(B, 1, H, W) for s in (s0, s1, s2))


_splits_pallas = jax.jit(_splits_pallas_impl)


@jax.jit
def _splits_xla(x):
    """Plain-XLA fallback for tiny inputs (fuses into consumers)."""
    return tuple(x[:, i:i + 1, :, :] for i in range(3))


# Below this many bytes, kernel-launch / pipeline-prologue overhead dominates
# and plain XLA slices are strictly better.
_PALLAS_MIN_BYTES = 1 << 20  # 1 MiB


def forward(x, *, force_pallas=False):
    """Matches Model.forward(v1) -> (concatenated_tensor, split_tensors).

    concatenated_tensor == v1 identically, so the input array is returned
    directly (zero HBM traffic).  The split pieces are independent arrays
    (PyTorch returns views); materializing them costs one read + one write.
    """
    B, C, H, W = x.shape
    nbytes = x.size * jnp.dtype(x.dtype).itemsize
    lane_ok = (H * W) % 128 == 0
    if force_pallas or (lane_ok and nbytes >= _PALLAS_MIN_BYTES):
        splits = _splits_pallas(x)
    else:
        splits = _splits_xla(x)
    return x, splits


if __name__ == "__main__":
    key = jax.random.PRNGKey(0)
    B, C, H, W = 2, 3, 16, 16          # forward requires exactly 3 channels
    x = jax.random.normal(key, (B, C, H, W), dtype=jnp.float32)

    # Force the Pallas path so the kernel is actually exercised at this size.
    concatenated, splits = forward(x, force_pallas=True)
    jax.block_until_ready(concatenated)
    jax.block_until_ready(splits)

    # Reference semantics checks.
    assert concatenated.shape == (B, C, H, W)
    assert bool(jnp.array_equal(concatenated, x))
    assert len(splits) == 3
    for i, s in enumerate(splits):
        assert s.shape == (B, 1, H, W)
        assert bool(jnp.allclose(s, x[:, i:i + 1, :, :]))

    # Also check the size-gated dispatch path stays correct.
    _, splits_xla = forward(x)
    jax.block_until_ready(splits_xla)
    for i, s in enumerate(splits_xla):
        assert bool(jnp.allclose(s, x[:, i:i + 1, :, :]))

    print("KERNEL_OK")
</pallas_src>

<mosaic_0001>
module attributes {stable_mosaic.version = 11 : i64} {
  func.func @_split_kernel(%arg0: i32, %arg1: memref<2x768xf32, #tpu.memory_space<vmem>>, %arg2: memref<2x256xf32, #tpu.memory_space<vmem>>, %arg3: memref<2x256xf32, #tpu.memory_space<vmem>>, %arg4: memref<2x256xf32, #tpu.memory_space<vmem>>) attributes {dimension_semantics = [#tpu.dimension_semantics<parallel>], iteration_bounds = array<i64: 1>, scalar_prefetch = 0 : i64, scratch_operands = 0 : i64, tpu.core_type = #tpu.core_type<tc>, window_params = [{transform_indices = @transform_0, window_bounds = array<i64: 2, 768>}, {transform_indices = @transform_1, window_bounds = array<i64: 2, 256>}, {transform_indices = @transform_2, window_bounds = array<i64: 2, 256>}, {transform_indices = @transform_3, window_bounds = array<i64: 2, 256>}]} {
    %c0 = arith.constant 0 : index
    %c0_0 = arith.constant 0 : index
    %0 = vector.load %arg1[%c0, %c0_0] : memref<2x768xf32, #tpu.memory_space<vmem>>, vector<2x768xf32>
    %1 = vector.extract_strided_slice %0 {offsets = [0, 0], sizes = [2, 256], strides = [1, 1]} : vector<2x768xf32> to vector<2x256xf32>
    %c0_1 = arith.constant 0 : index
    %c0_2 = arith.constant 0 : index
    %2 = vector.load %arg2[%c0_1, %c0_2] : memref<2x256xf32, #tpu.memory_space<vmem>>, vector<2x256xf32>
    tpu.vector_store %arg2[%c0_1, %c0_2], %1 {strides = array<i32>} : memref<2x256xf32, #tpu.memory_space<vmem>>, vector<2x256xf32>,
    %3 = vector.extract_strided_slice %0 {offsets = [0, 256], sizes = [2, 256], strides = [1, 1]} : vector<2x768xf32> to vector<2x256xf32>
    %c0_3 = arith.constant 0 : index
    %c0_4 = arith.constant 0 : index
    %4 = vector.load %arg3[%c0_3, %c0_4] : memref<2x256xf32, #tpu.memory_space<vmem>>, vector<2x256xf32>
    tpu.vector_store %arg3[%c0_3, %c0_4], %3 {strides = array<i32>} : memref<2x256xf32, #tpu.memory_space<vmem>>, vector<2x256xf32>,
    %5 = vector.extract_strided_slice %0 {offsets = [0, 512], sizes = [2, 256], strides = [1, 1]} : vector<2x768xf32> to vector<2x256xf32>
    %c0_5 = arith.constant 0 : index
    %c0_6 = arith.constant 0 : index
    %6 = vector.load %arg4[%c0_5, %c0_6] : memref<2x256xf32, #tpu.memory_space<vmem>>, vector<2x256xf32>
    tpu.vector_store %arg4[%c0_5, %c0_6], %5 {strides = array<i32>} : memref<2x256xf32, #tpu.memory_space<vmem>>, vector<2x256xf32>,
    return
  }
  func.func @transform_0(%arg0: i32) -> (i32, i32) {
    %c0_i32 = arith.constant 0 : i32
    %c0_i32_0 = arith.constant 0 : i32
    return %arg0, %c0_i32 : i32, i32
  }
  func.func @transform_1(%arg0: i32) -> (i32, i32) {
    %c0_i32 = arith.constant 0 : i32
    %c0_i32_0 = arith.constant 0 : i32
    return %arg0, %c0_i32 : i32, i32
  }
  func.func @transform_2(%arg0: i32) -> (i32, i32) {
    %c0_i32 = arith.constant 0 : i32
    %c0_i32_0 = arith.constant 0 : i32
    return %arg0, %c0_i32 : i32, i32
  }
  func.func @transform_3(%arg0: i32) -> (i32, i32) {
    %c0_i32 = arith.constant 0 : i32
    %c0_i32_0 = arith.constant 0 : i32
    return %arg0, %c0_i32 : i32, i32
  }
}

</mosaic_0001>

<llo_original>
// kernel: _splits_pallas_impl.1
$region0: #{_splits_pallas_impl.1}
  #allocation0 [shape = 'u32[]', space=smem, size = 0x4, offset = 0x4, fixed_abs, tag = 'smem constant byte address 0x4 - core index']
  #allocation1 [shape = 'u32[144,128]{1,0:T(1,128)}', space=vmem, size = 0x12000, scoped, tag = 'internal scratch']
  %s0 = inlined_call_operand.vmem [shape: f32[2,768], index: 0, kind: input, shape index: {}]
  %s1 = inlined_call_operand.vmem [shape: f32[2,256], index: 1, kind: output, shape index: {0}]
  %s2 = inlined_call_operand.vmem [shape: f32[2,256], index: 2, kind: output, shape index: {1}]
  %s3 = inlined_call_operand.vmem [shape: f32[2,256], index: 3, kind: output, shape index: {2}]
  %4 = xla_tuple %s1, %s2, %s3
  %s5 = sld [smem:[#allocation0]]
  $region30: #{_splits_pallas_impl.1} parent=0
    _
  %s7 = ssub.s32 1, %s5
  %s8 = scalar_select 0, %s7, %s5
  // Predicated region
  $region2: #{_splits_pallas_impl.1} parent=0 // pred_check
    _
  $region3: #{_splits_pallas_impl.1} parent=0 // pred_check_branch
    %10 = sbr.rel (0) target = $region5
  $region4: #{_splits_pallas_impl.1} parent=0 // pred_region
    _
  $region5: #{_splits_pallas_impl.1} parent=0 // pred_fallthru
    _
  %v11 = vld [vmem:[%s0] sm:$0xff]
  %v12 = vld [vmem:[%s0 + $0x8] sm:$0xf]
  %13 = vst [vmem:[%s1] sm:$0xf] %v11
  %v15 = vrot.slane %v11, 4
  %17 = vst [vmem:[%s2] sm:$0xf] %v15
  %18 = vst [vmem:[%s3] sm:$0xf] %v12
  // Predicated region
  $region6: #{_splits_pallas_impl.1} parent=0 // pred_check
    _
  $region7: #{_splits_pallas_impl.1} parent=0 // pred_check_branch
    %20 = sbr.rel (0) target = $region9
  $region8: #{_splits_pallas_impl.1} parent=0 // pred_region
    _
  $region9: #{_splits_pallas_impl.1} parent=0 // pred_fallthru
    _
  // Predicated region
  $region10: #{_splits_pallas_impl.1} parent=0 // pred_check
    _
  $region11: #{_splits_pallas_impl.1} parent=0 // pred_check_branch
    %22 = sbr.rel (0) target = $region13
  $region12: #{_splits_pallas_impl.1} parent=0 // pred_region
    _
  $region13: #{_splits_pallas_impl.1} parent=0 // pred_fallthru
    _
  // Predicated region
  $region14: #{_splits_pallas_impl.1} parent=0 // pred_check
    _
  $region15: #{_splits_pallas_impl.1} parent=0 // pred_check_branch
    %24 = sbr.rel (0) target = $region17
  $region16: #{_splits_pallas_impl.1} parent=0 // pred_region
    _
  $region17: #{_splits_pallas_impl.1} parent=0 // pred_fallthru
    _
  // Predicated region
  $region18: #{_splits_pallas_impl.1} parent=0 // pred_check
    _
  $region19: #{_splits_pallas_impl.1} parent=0 // pred_check_branch
    %26 = sbr.rel (0) target = $region21
  $region20: #{_splits_pallas_impl.1} parent=0 // pred_region
    _
  $region21: #{_splits_pallas_impl.1} parent=0 // pred_fallthru
    _
  // Predicated region
  $region22: #{_splits_pallas_impl.1} parent=0 // pred_check
    _
  $region23: #{_splits_pallas_impl.1} parent=0 // pred_check_branch
    %28 = sbr.rel (0) target = $region25
  $region24: #{_splits_pallas_impl.1} parent=0 // pred_region
    _
  $region25: #{_splits_pallas_impl.1} parent=0 // pred_fallthru
    _
  // Predicated region
  $region26: #{_splits_pallas_impl.1} parent=0 // pred_check
    _
  $region27: #{_splits_pallas_impl.1} parent=0 // pred_check_branch
    %30 = sbr.rel (0) target = $region29
  $region28: #{_splits_pallas_impl.1} parent=0 // pred_region
    _
  $region29: #{_splits_pallas_impl.1} parent=0 // pred_fallthru
    _

</llo_original>
